<compile_context>
chip_gen: v7x
topology: tpu7x:2x2x1
jax: 0.10.0
libtpu: 0.0.40
codegen_flags: <defaults>
</compile_context>

<pallas_src>
import math

import jax
import jax.numpy as jnp
from jax.experimental import pallas as pl
from jax.experimental.pallas import tpu as pltpu


def build_positional_encoding(d_model: int, max_len: int = 100) -> jnp.ndarray:
    """Deterministic sinusoidal table, identical to the PyTorch __init__."""
    position = jnp.arange(0, max_len, dtype=jnp.float32)[:, None]           # (max_len, 1)
    div_term = jnp.exp(
        jnp.arange(0, d_model, 2, dtype=jnp.float32) * (-math.log(10000.0) / d_model)
    )                                                                        # (d_model/2,)
    pe = jnp.zeros((max_len, d_model), dtype=jnp.float32)
    pe = pe.at[:, 0::2].set(jnp.sin(position * div_term))
    pe = pe.at[:, 1::2].set(jnp.cos(position * div_term))
    return pe[None, :, :]                                                    # (1, max_len, d_model)


def _pe_add_kernel(x_ref, pe_ref, o_ref):
    # x_ref/o_ref: (TM, LANES) tile of flattened activations
    # pe_ref:      (SUB, LANES) positional row pre-broadcast to one sublane tile
    tm, lanes = x_ref.shape
    r = pe_ref.shape[0]
    if tm == r:
        o_ref[...] = x_ref[...] + pe_ref[...]
    elif tm > r and tm % r == 0:
        # tm is a multiple of the dtype sublane packing by construction, so this
        # reshape is tile-aligned (no relayout) and the broadcast is along a
        # leading dim only -> pure full-vreg VPU adds, no sublane shuffles.
        x = x_ref[...].reshape(tm // r, r, lanes)
        o_ref[...] = (x + pe_ref[...][None, :, :]).reshape(tm, lanes)
    else:
        # Tiny tile (< one sublane group): 1-row broadcast fallback.
        o_ref[...] = x_ref[...] + pe_ref[0:1, :]


def _choose_row_packing(n_rows: int, d: int,
                        target_lanes: int = 2048, max_lanes: int = 4096):
    """Pick k logical D-rows per physical row so lanes = k*d is a multiple of 128.

    Returns (k, lanes). k is None when no packing is possible; caller falls back
    to a full-extent last dim of d (masked stores)."""
    k0 = math.lcm(d, 128) // d
    candidates = []
    if n_rows % k0 == 0:
        k = k0
        while k * d <= max_lanes:
            if n_rows % k == 0:
                candidates.append(k)
            k += k0
    if not candidates:
        if d % 128 == 0:
            return 1, d            # already lane-dense, just can't widen further
        return None, d             # masked-store fallback
    at_or_below = [k for k in candidates if k * d <= target_lanes]
    k = max(at_or_below) if at_or_below else min(candidates)
    return k, k * d


def positional_encoding_forward(
    x: jnp.ndarray,
    pe: jnp.ndarray,
    *,
    target_block_bytes: int = 4 << 20,   # ~4 MiB blocks (2-6 MiB sweet spot per review)
    min_grid_steps: int = 4,             # keep both v7x TCs busy + DMA pipeline primed
    force_pallas: bool = False,
    min_pallas_bytes: int = 32 << 20,    # below this, XLA's fused add already hits roofline
    donate_input: bool = False,          # alias x's HBM buffer for the output
) -> jnp.ndarray:
    """x: (B, T, D). pe: (1, max_len, D). Returns (B, T, D) = x + pe[:, T, :]."""
    B, T, D = x.shape
    max_len = pe.shape[1]
    if T >= max_len:
        # PyTorch would raise an index error; JAX indexing would silently clamp.
        raise ValueError(f"seq_len {T} out of range for PE table (max_len={max_len})")

    out_dtype = jnp.promote_types(x.dtype, pe.dtype)     # torch: x + float32 buffer
    pe_row = pe[0, T, :].astype(out_dtype)               # the single row at index T

    itemsize = jnp.dtype(out_dtype).itemsize
    n_elems = B * T * D
    total_bytes = n_elems * itemsize

    # Fast path: for anything XLA can fuse, the fused elementwise add is already
    # at the HBM roofline (and can fuse with producers/consumers, which a
    # pallas_call would prevent). Only take the kernel for large activations.
    if not force_pallas and total_bytes < min_pallas_bytes:
        # TODO(synk): nn.Dropout(p=0.1) is stochastic in training mode; forward
        # is reproduced in eval mode (identity).
        return x.astype(out_dtype) + pe_row[None, None, :]

    # ---- Lane-dense 2D repack ---------------------------------------------
    k, lanes = _choose_row_packing(B * T, D)
    if k is None:
        pe_vec = pe_row                  # fallback: last dim = D (full extent)
    else:
        pe_vec = jnp.tile(pe_row, k) if k > 1 else pe_row
    rows = n_elems // lanes
    x2 = x.astype(out_dtype).reshape(rows, lanes)

    # Pre-broadcast PE to one full sublane tile so the kernel add is full-vreg.
    sub = max(8, 32 // itemsize)         # sublane packing: 8 f32, 16 bf16, 32 int8
    pe2 = jnp.broadcast_to(pe_vec.reshape(1, lanes), (sub, lanes))

    # ---- Row tiling from the VMEM block budget ------------------------------
    max_tm = max(sub, (target_block_bytes // (lanes * itemsize)) // sub * sub)
    tm = min(rows, max_tm)
    if tm >= sub:
        tm = (tm // sub) * sub           # sublane-packing aligned
    # Keep >= min_grid_steps steps when the array is big enough to split: both
    # v7x TensorCores get work and the per-core DMA pipeline stays filled.
    cap = ((rows // min_grid_steps) // sub) * sub
    if cap >= sub:
        tm = min(tm, cap)
    grid_steps = pl.cdiv(rows, tm)

    def _x_index(i):
        return (i, 0)

    # Triple-buffer the streamed input when there are enough steps to benefit.
    x_spec = pl.BlockSpec((tm, lanes), _x_index)
    if grid_steps >= 4 and hasattr(pl, "Buffered"):
        try:
            x_spec = pl.BlockSpec((tm, lanes), _x_index, pipeline_mode=pl.Buffered(3))
        except TypeError:
            pass                          # older API without pipeline_mode

    cost = pl.CostEstimate(
        flops=n_elems,
        transcendentals=0,
        bytes_accessed=2 * total_bytes + sub * lanes * itemsize,
    )

    out2 = pl.pallas_call(
        _pe_add_kernel,
        out_shape=jax.ShapeDtypeStruct((rows, lanes), out_dtype),
        grid_spec=pltpu.PrefetchScalarGridSpec(
            num_scalar_prefetch=0,
            grid=(grid_steps,),
            in_specs=[
                x_spec,
                pl.BlockSpec((sub, lanes), lambda i: (0, 0)),
            ],
            out_specs=pl.BlockSpec((tm, lanes), _x_index),
        ),
        compiler_params=pltpu.CompilerParams(
            # Single "parallel" row axis: pipelined DMA on all generations and
            # shared across both TensorCores on v7x.
            dimension_semantics=("parallel",),
            vmem_limit_bytes=40 * 1024 * 1024,
        ),
        cost_estimate=cost,
        # Aliasing reuses x's HBM buffer for the output (no bandwidth change).
        # Off by default because the caller may still hold x (the demo does).
        input_output_aliases=({0: 0} if donate_input else {}),
    )(x2, pe2)

    # TODO(synk): nn.Dropout(p=0.1) is training-mode stochastic; reproduced here
    # in eval mode (identity). A training path could use pltpu.prng_seed +
    # pltpu.stateful_bernoulli inside the kernel.
    return out2.reshape(B, T, D)


if __name__ == "__main__":
    key = jax.random.PRNGKey(0)
    k1, k2 = jax.random.split(key)

    # --- Small-shape demo (typical FaceFormer sizes) -------------------------
    d_model, max_len, B, T = 32, 100, 2, 8
    x = jax.random.normal(k1, (B, T, d_model), dtype=jnp.float32)
    pe = build_positional_encoding(d_model, max_len)

    out = jax.block_until_ready(positional_encoding_forward(x, pe, force_pallas=True))
    ref = x + pe[:, T, :][:, None, :]
    assert out.shape == (B, T, d_model)
    assert out.dtype == ref.dtype
    assert jnp.allclose(out, ref, atol=1e-6), "mismatch vs reference (small)"

    # Fast path (default dispatch for tiny activations).
    out_fast = jax.block_until_ready(positional_encoding_forward(x, pe))
    assert jnp.allclose(out_fast, ref, atol=1e-6), "fast-path mismatch vs reference"

    # --- Mid-size check: exercises lcm lane-packing (D=96), multi-step grid,
    #     triple-buffered streaming and the full-sublane PE tile path. --------
    d_model2, max_len2, B2, T2 = 96, 600, 4, 512
    x_mid = jax.random.normal(k2, (B2, T2, d_model2), dtype=jnp.float32)
    pe_mid = build_positional_encoding(d_model2, max_len2)

    out_mid = jax.block_until_ready(
        positional_encoding_forward(x_mid, pe_mid, force_pallas=True)
    )
    ref_mid = x_mid + pe_mid[:, T2, :][:, None, :]
    assert out_mid.shape == (B2, T2, d_model2)
    assert jnp.allclose(out_mid, ref_mid, atol=1e-6), "mismatch vs reference (mid)"

    print("KERNEL_OK")
</pallas_src>

<mosaic_0001>
module attributes {stable_mosaic.version = 11 : i64} {
  func.func @_pe_add_kernel(%arg0: i32, %arg1: memref<1x512xf32, #tpu.memory_space<vmem>>, %arg2: memref<8x512xf32, #tpu.memory_space<vmem>>, %arg3: memref<1x512xf32, #tpu.memory_space<vmem>>) attributes {dimension_semantics = [#tpu.dimension_semantics<parallel>], iteration_bounds = array<i64: 1>, scalar_prefetch = 0 : i64, scratch_operands = 0 : i64, tpu.core_type = #tpu.core_type<tc>, window_params = [{transform_indices = @transform_0, window_bounds = array<i64: 1, 512>}, {pipeline_mode = #tpu.pipeline_mode<synchronous>, transform_indices = @transform_1, window_bounds = array<i64: 8, 512>}, {transform_indices = @transform_2, window_bounds = array<i64: 1, 512>}]} {
    %c0 = arith.constant 0 : index
    %c0_0 = arith.constant 0 : index
    %0 = vector.load %arg1[%c0, %c0_0] : memref<1x512xf32, #tpu.memory_space<vmem>>, vector<1x512xf32>
    %c0_1 = arith.constant 0 : index
    %c0_2 = arith.constant 0 : index
    %1 = vector.load %arg2[%c0_1, %c0_2] : memref<8x512xf32, #tpu.memory_space<vmem>>, vector<1x512xf32>
    %2 = arith.addf %0, %1 : vector<1x512xf32>
    %c0_3 = arith.constant 0 : index
    %c0_4 = arith.constant 0 : index
    %3 = vector.load %arg3[%c0_3, %c0_4] : memref<1x512xf32, #tpu.memory_space<vmem>>, vector<1x512xf32>
    tpu.vector_store %arg3[%c0_3, %c0_4], %2 {strides = array<i32>} : memref<1x512xf32, #tpu.memory_space<vmem>>, vector<1x512xf32>,
    return
  }
  func.func @transform_0(%arg0: i32) -> (i32, i32) {
    %c0_i32 = arith.constant 0 : i32
    %c0_i32_0 = arith.constant 0 : i32
    return %arg0, %c0_i32 : i32, i32
  }
  func.func @transform_1(%arg0: i32) -> (i32, i32) {
    %c0_i32 = arith.constant 0 : i32
    %c0_i32_0 = arith.constant 0 : i32
    %c0_i32_1 = arith.constant 0 : i32
    return %c0_i32, %c0_i32_0 : i32, i32
  }
  func.func @transform_2(%arg0: i32) -> (i32, i32) {
    %c0_i32 = arith.constant 0 : i32
    %c0_i32_0 = arith.constant 0 : i32
    return %arg0, %c0_i32 : i32, i32
  }
}

</mosaic_0001>

<llo_original>
// kernel: tpu_custom_call.1
$region0: #{tpu_custom_call.1}
  #allocation0 [shape = 'u32[]', space=smem, size = 0x4, offset = 0x4, fixed_abs, tag = 'smem constant byte address 0x4 - core index']
  #allocation1 [shape = 'u32[144,128]{1,0:T(1,128)}', space=vmem, size = 0x12000, scoped, tag = 'internal scratch']
  %s0 = inlined_call_operand.hbm [shape: f32[1,512], index: 0, kind: input, shape index: {}]
  %s1 = inlined_call_operand.hbm [shape: f32[8,512], index: 1, kind: input, shape index: {}]
  %s2 = inlined_call_operand.hbm [shape: f32[1,512], index: 2, kind: output, shape index: {}]
  %s3 = sld [smem:[#allocation0]]
  $region26: #{tpu_custom_call.1} parent=0
    _
  %s5 = ssub.s32 1, %s3
  %s6 = scalar_select 0, %s5, %s3
  $region1: #{tpu_custom_call.1} parent=0
    #allocation2 [shape = 'u8[2048]{0}', space=vmem, size = 0x800, scoped, tag = 'input window, operand 0, single buffered']
    #allocation3 [shape = 's32[1]{0}', space=sflag, size = 0x4, scoped, tag = 'scoped memory for tpu_custom_call.1']
    #allocation4 [shape = 's32[1]{0}', space=sflag, size = 0x4, scoped, tag = 'scoped memory for tpu_custom_call.1']
    #allocation5 [shape = 'u8[16384]{0}', space=vmem, size = 0x4000, scoped, tag = 'input window, operand 1, single buffered']
    #allocation6 [shape = 's32[1]{0}', space=sflag, size = 0x4, scoped, tag = 'scoped memory for tpu_custom_call.1']
    #allocation7 [shape = 'u8[2048]{0}', space=vmem, size = 0x800, scoped, tag = 'output window, operand 0, single buffered']
    %7 = vsyncpa [#allocation3], 0
    %8 = vsyncpa [#allocation6], 0
    %9 = vsyncpa [#allocation4], 0
    // Predicated region
    $region2: #{tpu_custom_call.1} parent=1 // pred_check
      _
    $region3: #{tpu_custom_call.1} parent=1 // pred_check_branch
      %11 = sbr.rel (0) target = $region5
    $region4: #{tpu_custom_call.1} parent=1 // pred_region
      %s13 = ssub.s32 64, 64
      %14 = vsyncadd [#allocation3], %s13
      %s16 = sshll.u32 [#allocation2], 4
      %s17 = int_to_ptr.vmem [resolvable:$true] %s16
      %19 = dma.hbm_to_vmem [thread:$0]  %s0, 64, %s17, [#allocation3]
    $region5: #{tpu_custom_call.1} parent=1 // pred_fallthru
      _
    // Predicated region
    $region6: #{tpu_custom_call.1} parent=1 // pred_check
      _
    $region7: #{tpu_custom_call.1} parent=1 // pred_check_branch
      %21 = sbr.rel (0) target = $region9
    $region8: #{tpu_custom_call.1} parent=1 // pred_region
      %s23 = ssub.s32 512, 512
      %24 = vsyncadd [#allocation6], %s23
      %s26 = sshll.u32 [#allocation5], 4
      %s27 = int_to_ptr.vmem [resolvable:$true] %s26
      %29 = dma.hbm_to_vmem [thread:$0]  %s1, 512, %s27, [#allocation6]
    $region9: #{tpu_custom_call.1} parent=1 // pred_fallthru
      _
    // Predicated region
    $region10: #{tpu_custom_call.1} parent=1 // pred_check
      _
    $region11: #{tpu_custom_call.1} parent=1 // pred_check_branch
      %31 = sbr.rel (0) target = $region13
    $region12: #{tpu_custom_call.1} parent=1 // pred_region
      %32 = dma.done [#allocation3], 64
    $region13: #{tpu_custom_call.1} parent=1 // pred_fallthru
      _
    // Predicated region
    $region14: #{tpu_custom_call.1} parent=1 // pred_check
      _
    $region15: #{tpu_custom_call.1} parent=1 // pred_check_branch
      %34 = sbr.rel (0) target = $region17
    $region16: #{tpu_custom_call.1} parent=1 // pred_region
      %35 = dma.done [#allocation6], 512
    $region17: #{tpu_custom_call.1} parent=1 // pred_fallthru
      _
    %v36 = vld [vmem:[#allocation2] sm:$0xf]
    %v37 = vld [vmem:[#allocation5] ss:$8 sm:$0xf]
    %v38 = vadd.f32 %v36, %v37
    %v39 = vlaneseq
    %vm40 = vcmp.ge.s32.totalorder %v39, 0
    %vm41 = vcmp.lt.s32.totalorder %v39, 512
    %vm42 = vmand %vm40, %vm41
    %43 = vst.msk [vmem:[#allocation7] sm:$0xf] %vm42, %v38
    // Predicated region
    $region18: #{tpu_custom_call.1} parent=1 // pred_check
      _
    $region19: #{tpu_custom_call.1} parent=1 // pred_check_branch
      %45 = sbr.rel (0) target = $region21
    $region20: #{tpu_custom_call.1} parent=1 // pred_region
      %s47 = ssub.s32 64, 64
      %48 = vsyncadd [#allocation4], %s47
      %s50 = sshll.u32 [#allocation7], 4
      %s51 = int_to_ptr.vmem [resolvable:$true] %s50
      %53 = dma.vmem_to_hbm [thread:$0]  %s51, 64, %s2, [#allocation4]
    $region21: #{tpu_custom_call.1} parent=1 // pred_fallthru
      _
    // Predicated region
    $region22: #{tpu_custom_call.1} parent=1 // pred_check
      _
    $region23: #{tpu_custom_call.1} parent=1 // pred_check_branch
      %55 = sbr.rel (0) target = $region25
    $region24: #{tpu_custom_call.1} parent=1 // pred_region
      %56 = dma.done [#allocation4], 64
    $region25: #{tpu_custom_call.1} parent=1 // pred_fallthru
      _
    %57 = vsyncpa [#allocation3], 1
    %58 = vsyncpa [#allocation6], 1
    %59 = vsyncpa [#allocation4], 1

</llo_original>
